<compile_context>
chip_gen: v5e
topology: v5e:2x2
jax: 0.10.0
libtpu: 0.0.40
codegen_flags: <defaults>
</compile_context>

<pallas_src>
import functools

import jax
import jax.numpy as jnp
from jax.experimental import pallas as pl
from jax.experimental.pallas import tpu as pltpu

# ----------------------------- configuration -----------------------------
IMG_H = 16
IMG_W = 16
NUM_VOXELS = 128          # number of active voxels in the demo
SOFT_TEMP = 4.0           # soft-sorting temperature (exp(-depth / temp))
EPS = 1e-8
BG_COLOR = 1.0            # white background
LANE = 128


# ------------------------------ Pallas kernel ----------------------------
def _raster_kernel(attrT_ref, coef_ref, out_ref, acc_ref, *, width, n_chunks):
    """One (pixel-tile, voxel-chunk) grid step.

    attrT_ref: [8, Nc]  rows = [cr*s, cg*s, cb*s, depth*s, s, alpha, 0, 0]
               with s = alpha * exp(-(depth - depth_min)/SOFT_TEMP)
    coef_ref:  [Nc, 8]  quadratic-form coeffs [-g, 2g*u, 2g*v, -g*(u^2+v^2), 0...],
               g = 1/(2*sigma^2), so coef @ basis = -g*((px-u)^2 + (py-v)^2)
    out_ref:   [8, TP]  rows 0..4 = [r, g, b, depth, alpha]; pixels on lanes.
    acc_ref:   [8, TP]  f32 VMEM accumulator, persists across the voxel-chunk axis.
    """
    k = pl.program_id(1)
    tp = out_ref.shape[1]

    @pl.when(k == 0)
    def _():
        acc_ref[...] = jnp.zeros_like(acc_ref)

    # in-kernel pixel coordinates for this tile (pixels on the lane axis) -------
    base = pl.program_id(0) * tp
    pidx = (jax.lax.broadcasted_iota(jnp.int32, (1, tp), 1) + base).astype(jnp.float32)
    # floor((idx + 0.5)/W): every row boundary has a 0.5/W margin on both sides,
    # so the f32 divide cannot produce the off-by-one of idx*(1/W) at multiples of W.
    pyi = jnp.floor((pidx + 0.5) / width)
    px = pidx - pyi * width + 0.5          # [1, TP]
    py = pyi + 0.5                         # [1, TP]

    # pixel basis for the MXU quadratic form: rows = [px^2+py^2, px, py, 1, 0,0,0,0]
    ones = jnp.ones((1, tp), jnp.float32)
    zeros = jnp.zeros((1, tp), jnp.float32)
    basis = jnp.concatenate(
        [px * px + py * py, px, py, ones, zeros, zeros, zeros, zeros], axis=0)  # [8, TP]

    # Gaussian splat exponent via one MXU matmul: [Nc, 8] x [8, TP] -> [Nc, TP]
    expo = jnp.dot(coef_ref[...], basis, preferred_element_type=jnp.float32)
    w = jnp.exp(expo)                                                       # EUP

    # contract voxel attributes against splat weights on the MXU: [8, Nc] x [Nc, TP]
    # (f32 operands kept; bf16 cast of attrT/w would double MXU headroom on v6e/v7x
    #  if the matmul ever becomes the binding unit — not the bottleneck today.)
    acc_ref[...] += jnp.dot(attrT_ref[...], w, preferred_element_type=jnp.float32)

    @pl.when(k == n_chunks - 1)
    def _():
        res = acc_ref[...]
        inv_d = pl.reciprocal(res[4:5, :] + EPS, approx=True)   # soft-sort normalizer
        rgb_fg = res[0:3, :] * inv_d                            # [3, TP]
        d_out = res[3:4, :] * inv_d                             # [1, TP]
        a_out = 1.0 - jnp.exp(-res[5:6, :])                     # [1, TP] acc opacity
        rgb = rgb_fg * a_out + BG_COLOR * (1.0 - a_out)         # [3, TP]
        # direct row-slice stores; pad rows 5..7 are never read by the wrapper
        out_ref[0:3, :] = rgb
        out_ref[3:4, :] = d_out
        out_ref[4:5, :] = a_out


def _choose_pix_tile(n_pixels):
    # Large lane-dense tiles amortize the ~0.35us per-grid-step overhead; keep >= 2
    # tiles so both v7x TensorCores get work whenever the image is big enough.
    for t in (1024, 512, 256, 128):
        if n_pixels % t == 0 and n_pixels // t >= 2:
            return t
    if n_pixels % LANE == 0:
        return min(n_pixels, LANE)
    raise ValueError("pixel count (H*W) must be a multiple of 128")


def _choose_vox_chunk(n_vox):
    # Chunk bounds resident VMEM (and the [Nc,TP] w intermediate) independent of N.
    for c in (256, 128):
        if n_vox % c == 0:
            return c
    return n_vox


def _rasterize_pallas(attrT, coef, height, width):
    n_pixels = height * width
    n_vox = attrT.shape[1]
    pix_tile = _choose_pix_tile(n_pixels)
    vox_chunk = _choose_vox_chunk(n_vox)
    n_pix_tiles = n_pixels // pix_tile
    n_chunks = n_vox // vox_chunk

    kernel = functools.partial(_raster_kernel, width=float(width), n_chunks=n_chunks)

    # TODO(synk): for very large sparse scenes, add per-pixel-tile voxel culling via
    # scalar prefetch (PrefetchScalarGridSpec with host-built tile index lists) so each
    # pixel tile only contracts overlapping voxels.
    return pl.pallas_call(
        kernel,
        out_shape=jax.ShapeDtypeStruct((8, n_pixels), jnp.float32),
        grid_spec=pltpu.PrefetchScalarGridSpec(
            num_scalar_prefetch=0,
            grid=(n_pix_tiles, n_chunks),               # voxel reduction axis last
            in_specs=[
                pl.BlockSpec((8, vox_chunk), lambda i, k: (0, k)),   # attrT chunk (lane-dense)
                pl.BlockSpec((vox_chunk, 8), lambda i, k: (k, 0)),   # coef chunk
            ],
            out_specs=pl.BlockSpec((8, pix_tile), lambda i, k: (0, i)),
            scratch_shapes=[pltpu.VMEM((8, pix_tile), jnp.float32)],
        ),
        compiler_params=pltpu.CompilerParams(
            dimension_semantics=("parallel", "arbitrary")),
    )(attrT, coef)


# ------------------------------ JAX glue ----------------------------------
def project_voxels(positions, features, sizes, camera_matrix, intrinsics):
    """Project voxel centers to screen space and pack kernel inputs.

    Returns:
      attrT [8, Np]: pre-scaled attribute matrix (lane-dense) for the channel matmul.
      coef  [Np, 8]: quadratic-form coefficients for the MXU Gaussian exponent.
    (Np = N padded up to a multiple of 128; padded voxels have zero attributes.)
    """
    n = positions.shape[0]
    homog = jnp.concatenate([positions, jnp.ones((n, 1), jnp.float32)], axis=1)  # [N,4]
    p_cam = (homog @ camera_matrix.T)[:, :3]                                     # [N,3]
    depth = jnp.maximum(p_cam[:, 2], 1e-6)                                       # [N]
    proj = p_cam @ intrinsics.T                                                  # [N,3]
    u = proj[:, 0] / depth
    v = proj[:, 1] / depth

    alpha = jax.nn.sigmoid(features[:, 0])            # [N]  density -> opacity
    colors = jax.nn.sigmoid(features[:, 1:4])         # [N,3]

    fx = intrinsics[0, 0]
    sigma = jnp.maximum(sizes * fx / depth * 0.5, 0.5)    # screen-space splat radius
    g = 1.0 / (2.0 * sigma * sigma)

    # soft-sorting weight; shift by min depth so exp never underflows (neutral up to EPS)
    sort_w = jnp.exp(-(depth - jnp.min(depth)) * (1.0 / SOFT_TEMP))
    s = alpha * sort_w                                    # per-voxel composite scale

    zeros = jnp.zeros_like(depth)
    attrT = jnp.stack(
        [colors[:, 0] * s, colors[:, 1] * s, colors[:, 2] * s,
         depth * s, s, alpha, zeros, zeros], axis=0).astype(jnp.float32)     # [8, N]
    coef = jnp.stack(
        [-g, 2.0 * g * u, 2.0 * g * v, -g * (u * u + v * v),
         zeros, zeros, zeros, zeros], axis=1).astype(jnp.float32)            # [N, 8]

    # pad the voxel axis to a lane multiple; zero attributes => padded voxels contribute 0
    n_pad = (-n) % LANE
    if n_pad:
        attrT = jnp.pad(attrT, ((0, 0), (0, n_pad)))
        coef = jnp.pad(coef, ((0, n_pad), (0, 0)))
    return attrT, coef


def svraster_one_forward(voxel_positions, voxel_features, voxel_sizes,
                         camera_matrix, intrinsics, viewport_size=(IMG_W, IMG_H),
                         mode="training"):
    """Equivalent of SVRasterOne.forward: returns dict with 'rgb', 'depth', 'alpha'."""
    W, H = viewport_size

    attrT, coef = project_voxels(
        voxel_positions, voxel_features, voxel_sizes, camera_matrix, intrinsics)

    out = _rasterize_pallas(attrT, coef, H, W)          # [8, P] lane-dense slab

    rgb = jnp.transpose(out[0:3, :]).reshape(H, W, 3)
    depth = out[3, :].reshape(H, W)     # background pixels report depth ~0 (see notes)
    alpha = out[4, :].reshape(H, W)

    num_vox = voxel_positions.shape[0]
    return {
        "rgb": rgb,
        "depth": depth,
        "alpha": alpha,
        "voxel_stats": {"total_voxels": num_vox, "active_voxels": num_vox},
    }


# --------------------------------- main ------------------------------------
if __name__ == "__main__":
    key = jax.random.PRNGKey(0)
    k_pos, k_feat, k_size = jax.random.split(key, 3)

    # deterministic "sparse voxel grid" parameters (SparseVoxelGrid __init__ analogue)
    voxel_positions = jax.random.uniform(k_pos, (NUM_VOXELS, 3),
                                         minval=-1.0, maxval=1.0).astype(jnp.float32)
    voxel_features = jax.random.normal(k_feat, (NUM_VOXELS, 4)).astype(jnp.float32)  # density + rgb
    voxel_sizes = (0.05 + 0.05 * jax.random.uniform(k_size, (NUM_VOXELS,))).astype(jnp.float32)

    # camera: identity rotation, voxels pushed to z in [2, 4]
    camera_matrix = jnp.eye(4, dtype=jnp.float32).at[2, 3].set(3.0)
    fx = fy = float(IMG_W)
    intrinsics = jnp.array([[fx, 0.0, IMG_W / 2.0],
                            [0.0, fy, IMG_H / 2.0],
                            [0.0, 0.0, 1.0]], dtype=jnp.float32)

    out = svraster_one_forward(voxel_positions, voxel_features, voxel_sizes,
                               camera_matrix, intrinsics,
                               viewport_size=(IMG_W, IMG_H), mode="training")
    jax.block_until_ready(out["rgb"])
    jax.block_until_ready(out["depth"])
    jax.block_until_ready(out["alpha"])

    assert out["rgb"].shape == (IMG_H, IMG_W, 3)
    assert out["depth"].shape == (IMG_H, IMG_W)
    assert out["alpha"].shape == (IMG_H, IMG_W)
    assert bool(jnp.all(jnp.isfinite(out["rgb"])))
    assert bool(jnp.all(jnp.isfinite(out["depth"])))
    assert bool(jnp.all(jnp.isfinite(out["alpha"])))
    assert bool(jnp.all((out["alpha"] >= 0.0) & (out["alpha"] <= 1.0)))

    # TODO(synk): adaptive subdivision / pruning / Morton sort from SparseVoxelGrid are
    # dynamic-topology host-side ops with no clean Pallas equivalent.
    print("KERNEL_OK")
</pallas_src>

<mosaic_0001>
module attributes {stable_mosaic.version = 11 : i64} {
  func.func @_raster_kernel(%arg0: i32, %arg1: i32, %arg2: memref<8x128xf32, #tpu.memory_space<vmem>>, %arg3: memref<128x8xf32, #tpu.memory_space<vmem>>, %arg4: memref<8x128xf32, #tpu.memory_space<vmem>>, %arg5: memref<8x128xf32, #tpu.memory_space<vmem>>) attributes {dimension_semantics = [#tpu.dimension_semantics<parallel>, #tpu.dimension_semantics<arbitrary>], iteration_bounds = array<i64: 2, 1>, scalar_prefetch = 0 : i64, scratch_operands = 1 : i64, tpu.core_type = #tpu.core_type<tc>, window_params = [{transform_indices = @transform_0, window_bounds = array<i64: 8, 128>}, {transform_indices = @transform_1, window_bounds = array<i64: 128, 8>}, {transform_indices = @transform_2, window_bounds = array<i64: 8, 128>}]} {
    %c0_i32 = arith.constant 0 : i32
    %0 = arith.cmpi eq, %arg1, %c0_i32 : i32
    %1 = arith.extui %0 : i1 to i32
    %c0_i32_0 = arith.constant 0 : i32
    %2 = arith.cmpi ne, %1, %c0_i32_0 : i32
    scf.if %2 {
      %cst_18 = arith.constant 0.000000e+00 : f32
      %37 = vector.broadcast %cst_18 : f32 to vector<8x128xf32>
      %c0_19 = arith.constant 0 : index
      %c0_20 = arith.constant 0 : index
      %38 = vector.load %arg5[%c0_19, %c0_20] : memref<8x128xf32, #tpu.memory_space<vmem>>, vector<8x128xf32>
      tpu.vector_store %arg5[%c0_19, %c0_20], %37 {strides = array<i32>} : memref<8x128xf32, #tpu.memory_space<vmem>>, vector<8x128xf32>,
    } else {
    }
    %c128_i32 = arith.constant 128 : i32
    %3 = arith.muli %arg0, %c128_i32 : i32
    %4 = tpu.iota {dimensions = array<i32: 1>} : vector<1x128xi32>
    %5 = vector.broadcast %3 : i32 to vector<1x128xi32>
    %6 = arith.addi %4, %5 : vector<1x128xi32>
    %7 = arith.sitofp %6 : vector<1x128xi32> to vector<1x128xf32>
    %cst = arith.constant 5.000000e-01 : f32
    %8 = vector.broadcast %cst : f32 to vector<1x128xf32>
    %9 = arith.addf %7, %8 : vector<1x128xf32>
    %cst_1 = arith.constant 1.600000e+01 : f32
    %10 = vector.broadcast %cst_1 : f32 to vector<1x128xf32>
    %11 = arith.divf %9, %10 : vector<1x128xf32>
    %12 = math.floor %11 : vector<1x128xf32>
    %cst_2 = arith.constant 1.600000e+01 : f32
    %13 = vector.broadcast %cst_2 : f32 to vector<1x128xf32>
    %14 = arith.mulf %12, %13 : vector<1x128xf32>
    %15 = arith.subf %7, %14 : vector<1x128xf32>
    %cst_3 = arith.constant 5.000000e-01 : f32
    %16 = vector.broadcast %cst_3 : f32 to vector<1x128xf32>
    %17 = arith.addf %15, %16 : vector<1x128xf32>
    %cst_4 = arith.constant 5.000000e-01 : f32
    %18 = vector.broadcast %cst_4 : f32 to vector<1x128xf32>
    %19 = arith.addf %12, %18 : vector<1x128xf32>
    %cst_5 = arith.constant 1.000000e+00 : f32
    %20 = vector.broadcast %cst_5 : f32 to vector<1x128xf32>
    %cst_6 = arith.constant 0.000000e+00 : f32
    %21 = vector.broadcast %cst_6 : f32 to vector<1x128xf32>
    %22 = arith.mulf %17, %17 : vector<1x128xf32>
    %23 = arith.mulf %19, %19 : vector<1x128xf32>
    %24 = arith.addf %22, %23 : vector<1x128xf32>
    %25 = tpu.concatenate %24, %17, %19, %20, %21, %21, %21, %21 in 0 : vector<1x128xf32>, vector<1x128xf32>, vector<1x128xf32>, vector<1x128xf32>, vector<1x128xf32>, vector<1x128xf32>, vector<1x128xf32>, vector<1x128xf32> -> vector<8x128xf32>
    %c0 = arith.constant 0 : index
    %c0_7 = arith.constant 0 : index
    %26 = vector.load %arg3[%c0, %c0_7] : memref<128x8xf32, #tpu.memory_space<vmem>>, vector<128x8xf32>
    %cst_8 = arith.constant dense<0.000000e+00> : vector<128x128xf32>
    %27 = tpu.matmul %26, %25, %cst_8 {dimension_numbers = #tpu.dot_dimension_numbers<[1], [0], [0], [1], [0, 0, 1, 1], [], []>} : vector<128x8xf32>, vector<8x128xf32>, vector<128x128xf32> -> vector<128x128xf32>
    %28 = math.exp %27 : vector<128x128xf32>
    %c0_9 = arith.constant 0 : index
    %c0_10 = arith.constant 0 : index
    %29 = vector.load %arg5[%c0_9, %c0_10] : memref<8x128xf32, #tpu.memory_space<vmem>>, vector<8x128xf32>
    %c0_11 = arith.constant 0 : index
    %c0_12 = arith.constant 0 : index
    %30 = vector.load %arg2[%c0_11, %c0_12] : memref<8x128xf32, #tpu.memory_space<vmem>>, vector<8x128xf32>
    %cst_13 = arith.constant dense<0.000000e+00> : vector<8x128xf32>
    %31 = tpu.matmul %30, %28, %cst_13 {dimension_numbers = #tpu.dot_dimension_numbers<[1], [0], [0], [1], [0, 0, 1, 1], [], []>} : vector<8x128xf32>, vector<128x128xf32>, vector<8x128xf32> -> vector<8x128xf32>
    %32 = arith.addf %29, %31 : vector<8x128xf32>
    %c0_14 = arith.constant 0 : index
    %c0_15 = arith.constant 0 : index
    %33 = vector.load %arg5[%c0_14, %c0_15] : memref<8x128xf32, #tpu.memory_space<vmem>>, vector<8x128xf32>
    tpu.vector_store %arg5[%c0_14, %c0_15], %32 {strides = array<i32>} : memref<8x128xf32, #tpu.memory_space<vmem>>, vector<8x128xf32>,
    %c0_i32_16 = arith.constant 0 : i32
    %34 = arith.cmpi eq, %arg1, %c0_i32_16 : i32
    %35 = arith.extui %34 : i1 to i32
    %c0_i32_17 = arith.constant 0 : i32
    %36 = arith.cmpi ne, %35, %c0_i32_17 : i32
    scf.if %36 {
      %c0_18 = arith.constant 0 : index
      %c0_19 = arith.constant 0 : index
      %37 = vector.load %arg5[%c0_18, %c0_19] : memref<8x128xf32, #tpu.memory_space<vmem>>, vector<8x128xf32>
      %38 = vector.extract_strided_slice %37 {offsets = [4, 0], sizes = [1, 128], strides = [1, 1]} : vector<8x128xf32> to vector<1x128xf32>
      %cst_20 = arith.constant 9.99999993E-9 : f32
      %39 = vector.broadcast %cst_20 : f32 to vector<1x128xf32>
      %40 = arith.addf %38, %39 : vector<1x128xf32>
      %41 = tpu.reciprocal %40 {approx = true} : vector<1x128xf32> -> vector<1x128xf32>
      %42 = vector.extract_strided_slice %37 {offsets = [0, 0], sizes = [3, 128], strides = [1, 1]} : vector<8x128xf32> to vector<3x128xf32>
      %43 = vector.broadcast %41 : vector<1x128xf32> to vector<3x128xf32>
      %44 = arith.mulf %42, %43 : vector<3x128xf32>
      %45 = vector.extract_strided_slice %37 {offsets = [3, 0], sizes = [1, 128], strides = [1, 1]} : vector<8x128xf32> to vector<1x128xf32>
      %46 = arith.mulf %45, %41 : vector<1x128xf32>
      %47 = vector.extract_strided_slice %37 {offsets = [5, 0], sizes = [1, 128], strides = [1, 1]} : vector<8x128xf32> to vector<1x128xf32>
      %cst_21 = arith.constant 0.000000e+00 : f32
      %48 = vector.broadcast %cst_21 : f32 to vector<1x128xf32>
      %49 = arith.subf %48, %47 : vector<1x128xf32>
      %50 = math.exp %49 : vector<1x128xf32>
      %cst_22 = arith.constant 1.000000e+00 : f32
      %51 = vector.broadcast %cst_22 : f32 to vector<1x128xf32>
      %52 = arith.subf %51, %50 : vector<1x128xf32>
      %53 = vector.broadcast %52 : vector<1x128xf32> to vector<3x128xf32>
      %54 = arith.mulf %44, %53 : vector<3x128xf32>
      %cst_23 = arith.constant 1.000000e+00 : f32
      %55 = vector.broadcast %cst_23 : f32 to vector<1x128xf32>
      %56 = arith.subf %55, %52 : vector<1x128xf32>
      %cst_24 = arith.constant 1.000000e+00 : f32
      %57 = vector.broadcast %cst_24 : f32 to vector<1x128xf32>
      %58 = arith.mulf %57, %56 : vector<1x128xf32>
      %59 = vector.broadcast %58 : vector<1x128xf32> to vector<3x128xf32>
      %60 = arith.addf %54, %59 : vector<3x128xf32>
      %c0_25 = arith.constant 0 : index
      %c0_26 = arith.constant 0 : index
      %61 = vector.load %arg4[%c0_25, %c0_26] : memref<8x128xf32, #tpu.memory_space<vmem>>, vector<3x128xf32>
      tpu.vector_store %arg4[%c0_25, %c0_26], %60 {strides = array<i32>} : memref<8x128xf32, #tpu.memory_space<vmem>>, vector<3x128xf32>,
      %c3 = arith.constant 3 : index
      %c0_27 = arith.constant 0 : index
      %62 = vector.load %arg4[%c3, %c0_27] : memref<8x128xf32, #tpu.memory_space<vmem>>, vector<1x128xf32>
      tpu.vector_store %arg4[%c3, %c0_27], %46 {strides = array<i32>} : memref<8x128xf32, #tpu.memory_space<vmem>>, vector<1x128xf32>,
      %c4 = arith.constant 4 : index
      %c0_28 = arith.constant 0 : index
      %63 = vector.load %arg4[%c4, %c0_28] : memref<8x128xf32, #tpu.memory_space<vmem>>, vector<1x128xf32>
      tpu.vector_store %arg4[%c4, %c0_28], %52 {strides = array<i32>} : memref<8x128xf32, #tpu.memory_space<vmem>>, vector<1x128xf32>,
    } else {
    }
    return
  }
  func.func @transform_0(%arg0: i32, %arg1: i32) -> (i32, i32) {
    %c0_i32 = arith.constant 0 : i32
    %c0_i32_0 = arith.constant 0 : i32
    return %c0_i32, %arg1 : i32, i32
  }
  func.func @transform_1(%arg0: i32, %arg1: i32) -> (i32, i32) {
    %c0_i32 = arith.constant 0 : i32
    %c0_i32_0 = arith.constant 0 : i32
    return %arg1, %c0_i32 : i32, i32
  }
  func.func @transform_2(%arg0: i32, %arg1: i32) -> (i32, i32) {
    %c0_i32 = arith.constant 0 : i32
    %c0_i32_0 = arith.constant 0 : i32
    return %c0_i32, %arg0 : i32, i32
  }
}

</mosaic_0001>

<llo_original>
// kernel: tpu_custom_call.1
$region0: #{tpu_custom_call.1}
  #allocation0 [shape = 'u32[]', space=smem, size = 0x4, offset = 0x4, fixed_abs, tag = 'smem constant byte address 0x4 - core index']
  #allocation1 [shape = 'u32[72,128]{1,0:T(1,128)}', space=vmem, size = 0x9000, scoped, tag = 'internal scratch']
  #allocation2 [shape = 'f32[8,128]{1,0:T(8,128)}', space=vmem, size = 0x1000, scoped, tag = 'scratch operand']
  %s0 = inlined_call_operand.vmem [shape: f32[8,128], index: 0, kind: input, shape index: {}]
  %s1 = inlined_call_operand.vmem [shape: f32[128,8], index: 1, kind: input, shape index: {}]
  %s2 = inlined_call_operand.hbm [shape: f32[8,256], index: 2, kind: output, shape index: {}]
  %s3 = sld [smem:[#allocation0]]
  $region49: #{tpu_custom_call.1} parent=0
    _
  %s5 = ssub.s32 1, %s3
  %s6 = scalar_select 0, %s5, %s3
  $region1: #{tpu_custom_call.1} parent=0
    #allocation3 [shape = 'u8[8192]{0}', space=vmem, size = 0x2000, scoped, tag = 'output window, operand 0']
    #allocation4 [shape = 's32[2]{0}', space=sflag, size = 0x8, scoped, tag = 'scoped memory for tpu_custom_call.1']
    %7 = vsyncpa [#allocation4], 0
    %s8 = scalar_lea.sflag [#allocation4], 1
    %9 = vsyncpa %s8, 0
    loop: start=0, step=1, limit=4
    $region2: #{tpu_custom_call.1} parent=1 // loop_pre_header
      _
    $region3: #{tpu_custom_call.1} parent=1 // loop_header
      %s11 = sphi 0, %s15
      %p12 = scmp.ge.s32.totalorder %s11, 4
      %s18 = sphi 0, %s30
      %s19 = sphi 0, %s26
      %s20 = sphi 0, %s18
      %s21 = sphi 0, %s19
      %s22 = sphi 0, %s20
      %s23 = sphi 0, %s21
      %s33 = sphi 0, %s35
      %s36 = sphi 0, %s33
      %s37 = sphi 0, %s36
      %s53 = sphi 0, %s37
      %s59 = sphi 0, %s61
      %s62 = sphi 0, %s59
      %s63 = sphi 0, %s62
      %s79 = sphi 0, %s63
      %s85 = sphi 0, %s87
      %s88 = sphi 0, %s85
      %s89 = sphi 0, %s88
      %s105 = sphi 0, %s89
    $region4: #{tpu_custom_call.1} parent=1 // loop_header_branch
      %14 = sbr.rel (%p12) target = $region8
    $region5: #{tpu_custom_call.1} parent=1 // loop_body
      %s16 = ssub.s32 %s11, 1
      %s17 = ssub.s32 %s11, 2
      %s24 = sadd.s32 1, %s19
      %p25 = scmp.ge.s32.totalorder %s24, 1
      %s26 = scalar_select %p25, 0, %s24
      %s27 = sadd.s32 1, %s18
      %s28 = scalar_select %p25, %s27, %s18
      %p29 = scmp.ge.s32.totalorder %s28, 2
      %s30 = scalar_select %p29, 0, %s28
      %s31 = ssub.s32 %s19, %s26
      %p32 = scmp.eq.s32.totalorder %s31, 0
      %s34 = sadd.s32 %s33, 1
      %s35 = scalar_select %p32, %s33, %s34
      %p38 = pneg %p32
      %p39 = scmp.eq.s32.totalorder %s11, 1
      %p40 = por %p38, %p39
      %p41 = scmp.ne.s32.totalorder %s33, %s36
      %p42 = scmp.eq.s32.totalorder %s11, 0
      %p43 = por %p41, %p42
      %p44 = scmp.ne.s32.totalorder %s33, %s36
      %p45 = scmp.eq.s32.totalorder %s16, 1
      %p46 = por %p44, %p45
      %p47 = scmp.ne.s32.totalorder %s36, %s37
      %p48 = scmp.eq.s32.totalorder %s16, 0
      %p49 = por %p47, %p48
      %p50 = scmp.ne.s32.totalorder %s36, %s37
      %p51 = scmp.eq.s32.totalorder %s17, 1
      %p52 = por %p50, %p51
      %p54 = scmp.ne.s32.totalorder %s37, %s53
      %p55 = scmp.eq.s32.totalorder %s17, 0
      %p56 = por %p54, %p55
      %s57 = ssub.s32 %s19, %s26
      %p58 = scmp.eq.s32.totalorder %s57, 0
      %s60 = sadd.s32 %s59, 1
      %s61 = scalar_select %p58, %s59, %s60
      %p64 = pneg %p58
      %p65 = scmp.eq.s32.totalorder %s11, 1
      %p66 = por %p64, %p65
      %p67 = scmp.ne.s32.totalorder %s59, %s62
      %p68 = scmp.eq.s32.totalorder %s11, 0
      %p69 = por %p67, %p68
      %p70 = scmp.ne.s32.totalorder %s59, %s62
      %p71 = scmp.eq.s32.totalorder %s16, 1
      %p72 = por %p70, %p71
      %p73 = scmp.ne.s32.totalorder %s62, %s63
      %p74 = scmp.eq.s32.totalorder %s16, 0
      %p75 = por %p73, %p74
      %p76 = scmp.ne.s32.totalorder %s62, %s63
      %p77 = scmp.eq.s32.totalorder %s17, 1
      %p78 = por %p76, %p77
      %p80 = scmp.ne.s32.totalorder %s63, %s79
      %p81 = scmp.eq.s32.totalorder %s17, 0
      %p82 = por %p80, %p81
      %s83 = ssub.s32 %s18, %s30
      %p84 = scmp.eq.s32.totalorder %s83, 0
      %s86 = sadd.s32 %s85, 1
      %s87 = scalar_select %p84, %s85, %s86
      %p90 = pneg %p84
      %p91 = scmp.eq.s32.totalorder %s11, 1
      %p92 = por %p90, %p91
      %p93 = scmp.ne.s32.totalorder %s85, %s88
      %p94 = scmp.eq.s32.totalorder %s11, 0
      %p95 = por %p93, %p94
      %p96 = scmp.ne.s32.totalorder %s85, %s88
      %p97 = scmp.eq.s32.totalorder %s16, 1
      %p98 = por %p96, %p97
      %p99 = scmp.ne.s32.totalorder %s88, %s89
      %p100 = scmp.eq.s32.totalorder %s16, 0
      %p101 = por %p99, %p100
      %p102 = scmp.ne.s32.totalorder %s88, %s89
      %p103 = scmp.eq.s32.totalorder %s17, 1
      %p104 = por %p102, %p103
      %p106 = scmp.ne.s32.totalorder %s89, %s105
      %p107 = scmp.eq.s32.totalorder %s17, 0
      %p108 = por %p106, %p107
      %p109 = scmp.le.s32.totalorder 1, %s11
      %p110 = scmp.lt.s32.totalorder %s11, 3
      %p111 = pnand %p109, %p110
      %p112 = pneg %p111
      // Predicated region
      $region9: #{tpu_custom_call.1} parent=5 // pred_check
        _
      $region10: #{tpu_custom_call.1} parent=5 // pred_check_branch
        %114 = sbr.rel (%p111) target = $region12
      $region11: #{tpu_custom_call.1} parent=5 // pred_region
        %s115 = ssub.s32 %s11, 1
        // Predicated region
        $region13: #{tpu_custom_call.1} parent=11 // pred_check
          %p116 = pneg %p49
        $region14: #{tpu_custom_call.1} parent=11 // pred_check_branch
          %118 = sbr.rel (%p116) target = $region16
        $region15: #{tpu_custom_call.1} parent=11 // pred_region
          %p119 = scmp.lt.s32.totalorder %s21, 0
          %s120 = scalar_select %p119, %s21, 0
          %s121 = smul.addr %s120, 8
          %s122 = scalar_lea.vmem %s0, %s121
        $region16: #{tpu_custom_call.1} parent=11 // pred_fallthru
          _
        // Predicated region
        $region17: #{tpu_custom_call.1} parent=11 // pred_check
          %p123 = pneg %p75
        $region18: #{tpu_custom_call.1} parent=11 // pred_check_branch
          %125 = sbr.rel (%p123) target = $region20
        $region19: #{tpu_custom_call.1} parent=11 // pred_region
          %s126 = smul.u32 16, %s21
          %p127 = scmp.lt.s32.totalorder %s126, 15
          %s128 = scalar_select %p127, %s126, 15
          %s129 = smul.addr %s128, 8
          %s130 = scalar_lea.vmem %s1, %s129
          %s131 = smul.u32 16, %s21
        $region20: #{tpu_custom_call.1} parent=11 // pred_fallthru
          _
      $region12: #{tpu_custom_call.1} parent=5 // pred_fallthru
        _
      %p132 = scmp.lt.s32.totalorder %s11, 2
      // Predicated region
      $region21: #{tpu_custom_call.1} parent=5 // pred_check
        %p133 = pneg %p132
      $region22: #{tpu_custom_call.1} parent=5 // pred_check_branch
        %135 = sbr.rel (%p133) target = $region24
      $region23: #{tpu_custom_call.1} parent=5 // pred_region
        _
      $region24: #{tpu_custom_call.1} parent=5 // pred_fallthru
        _
      %p136 = scmp.le.s32.totalorder 1, %s11
      %p137 = scmp.lt.s32.totalorder %s11, 3
      %p138 = pnand %p136, %p137
      %p139 = pneg %p138
      // Predicated region
      $region25: #{tpu_custom_call.1} parent=5 // pred_check
        _
      $region26: #{tpu_custom_call.1} parent=5 // pred_check_branch
        %141 = sbr.rel (%p138) target = $region28
      $region27: #{tpu_custom_call.1} parent=5 // pred_region
        %s142 = ssub.s32 %s11, 1
        %p143 = scmp.lt.s32.totalorder %s21, 0
        %s144 = scalar_select %p143, %s21, 0
        %s145 = smul.addr %s144, 8
        %s146 = scalar_lea.vmem %s0, %s145
        %p147 = pneg %p49
        %p148 = pneg %p46
        %s149 = smul.u32 16, %s21
        %p150 = scmp.lt.s32.totalorder %s149, 15
        %s151 = scalar_select %p150, %s149, 15
        %s152 = smul.addr %s151, 8
        %s153 = scalar_lea.vmem %s1, %s152
        %p154 = pneg %p75
        %p155 = pneg %p72
        %p156 = pneg %p101
        %p157 = pneg %p98
        %s158 = sand.u32 %s88, 1
        %s159 = scalar_lea.sflag [#allocation4], %s158
        %s160 = sand.u32 %s88, 1
        %s161 = smul.addr %s160, 8
        %s162 = scalar_lea.vmem [#allocation3], %s161
        %p163 = scmp.lt.s32.totalorder %s21, 0
        %s164 = scalar_select %p163, %s21, 0
        %s165 = smul.addr %s164, 8
        %s166 = scalar_lea.vmem %s0, %s165
        %s167 = smul.u32 16, %s21
        %p168 = scmp.lt.s32.totalorder %s167, 15
        %s169 = scalar_select %p168, %s167, 15
        %s170 = smul.addr %s169, 8
        %s171 = scalar_lea.vmem %s1, %s170
        %s172 = smul.u32 16, %s21
        %p173 = scmp.eq.s32.totalorder %s21, 0
        // Predicated region
        $region29: #{tpu_custom_call.1} parent=27 // pred_check
          %p174 = pneg %p173
        $region30: #{tpu_custom_call.1} parent=27 // pred_check_branch
          %176 = sbr.rel (%p174) target = $region32
        $region31: #{tpu_custom_call.1} parent=27 // pred_region
          %177 = vst [vmem:[#allocation2] sm:$0xff] 0.0
        $region32: #{tpu_custom_call.1} parent=27 // pred_fallthru
          _
        %s178 = smul.u32 %s20, 128
        %v179 = vlaneseq
        %v180 = vand.u32 %v179, 127
        %v181 = vstv %s178
        %v182 = vadd.s32 %v180, %v181
        %v183 = vcvt.s32.f32 %v182
        %v184 = vadd.f32 %v183, 0.5
        %v185 = vrcp.pop 16.0
        %v186 = vmul.f32 16.0, %v185
        %v187 = vsub.f32 1.0, %v186
        %v188 = vmul.f32 %v185, %v187
        %v189 = vadd.f32 %v185, %v188
        %vm190 = vweird.f32 %v185
        %v191 = vsel %vm190, %v185, %v189
        %v192 = vmul.f32 %v184, %v191
        %v193 = vfloor.f32 %v192
        %v194 = vmul.f32 %v193, 16.0
        %v195 = vsub.f32 %v183, %v194
        %v196 = vadd.f32 %v195, 0.5
        %v197 = vadd.f32 %v193, 0.5
        %v198 = vmul.f32 %v196, %v196
        %v199 = vmul.f32 %v197, %v197
        %v200 = vadd.f32 %v198, %v199
        %vm201 = vcmask 1040384
        %v202 = vsel %vm201, %v200, %v196
        %vm203 = vcmask 1041408
        %v204 = vsel %vm203, %v202, %v197
        %vm205 = vcmask 1042432
        %v206 = vsel %vm205, %v204, 1.0
        %vm207 = vcmask 1043456
        %v208 = vsel %vm207, %v206, 0.0
        %vm209 = vcmask 1044480
        %v210 = vsel %vm209, %v208, 0.0
        %vm211 = vcmask 1045504
        %v212 = vsel %vm211, %v210, 0.0
        %vm213 = vcmask 1046528
        %v214 = vsel %vm213, %v212, 0.0
        %v215 = vld [vmem:[%s171] sm:$0xff]
        %v216 = vld [vmem:[%s171 + $0x8] sm:$0xff]
        %v217 = vld [vmem:[%s171 + $0x10] sm:$0xff]
        %v218 = vld [vmem:[%s171 + $0x18] sm:$0xff]
        %v219 = vld [vmem:[%s171 + $0x20] sm:$0xff]
        %v220 = vld [vmem:[%s171 + $0x28] sm:$0xff]
        %v221 = vld [vmem:[%s171 + $0x30] sm:$0xff]
        %v222 = vld [vmem:[%s171 + $0x38] sm:$0xff]
        %v223 = vld [vmem:[%s171 + $0x40] sm:$0xff]
        %v224 = vld [vmem:[%s171 + $0x48] sm:$0xff]
        %v225 = vld [vmem:[%s171 + $0x50] sm:$0xff]
        %v226 = vld [vmem:[%s171 + $0x58] sm:$0xff]
        %v227 = vld [vmem:[%s171 + $0x60] sm:$0xff]
        %v228 = vld [vmem:[%s171 + $0x68] sm:$0xff]
        %v229 = vld [vmem:[%s171 + $0x70] sm:$0xff]
        %v230 = vld [vmem:[%s171 + $0x78] sm:$0xff]
        %vm231 = vcmask 64512
        %v233 = vsel %vm231, %v215, 0
        %v236 = vsel %vm231, %v216, 0
        %v239 = vsel %vm231, %v217, 0
        %v242 = vsel %vm231, %v218, 0
        %v245 = vsel %vm231, %v219, 0
        %v248 = vsel %vm231, %v220, 0
        %v251 = vsel %vm231, %v221, 0
        %v254 = vsel %vm231, %v222, 0
        %v257 = vsel %vm231, %v223, 0
        %v260 = vsel %vm231, %v224, 0
        %v263 = vsel %vm231, %v225, 0
        %v266 = vsel %vm231, %v226, 0
        %v269 = vsel %vm231, %v227, 0
        %v272 = vsel %vm231, %v228, 0
        %v275 = vsel %vm231, %v229, 0
        %v278 = vsel %vm231, %v230, 0
        %280 = vmatpush.msra.mxu0 0.0
        %281 = vmatpush.msra.mxu0 0.0
        %282 = vmatpush.msra.mxu0 0.0
        %283 = vmatpush.msra.mxu0 0.0
        %284 = vmatpush.msra.mxu0 0.0
        %285 = vmatpush.msra.mxu0 0.0
        %286 = vmatpush.msra.mxu0 0.0
        %287 = vmatpush.msra.mxu0 0.0
        %288 = vmatpush.msra.mxu0 0.0
        %289 = vmatpush.msra.mxu0 0.0
        %290 = vmatpush.msra.mxu0 0.0
        %291 = vmatpush.msra.mxu0 0.0
        %292 = vmatpush.msra.mxu0 0.0
        %293 = vmatpush.msra.mxu0 0.0
        %294 = vmatpush.msra.mxu0 0.0
        %295 = vmatpush.msra.mxu0 %v214
        %296 = vmatmul.f32.gmra.mxu0 %v233
        %v297 = vpop.f32.mrf.mxu0
        %v298 = vadd.f32 0.0, %v297
        %299 = vmatmul.f32.gmra.mxu0 %v236
        %v300 = vpop.f32.mrf.mxu0
        %v301 = vadd.f32 0.0, %v300
        %302 = vmatmul.f32.gmra.mxu0 %v239
        %v303 = vpop.f32.mrf.mxu0
        %v304 = vadd.f32 0.0, %v303
        %305 = vmatmul.f32.gmra.mxu0 %v242
        %v306 = vpop.f32.mrf.mxu0
        %v307 = vadd.f32 0.0, %v306
        %308 = vmatmul.f32.gmra.mxu0 %v245
        %v309 = vpop.f32.mrf.mxu0
        %v310 = vadd.f32 0.0, %v309
        %311 = vmatmul.f32.gmra.mxu0 %v248
        %v312 = vpop.f32.mrf.mxu0
        %v313 = vadd.f32 0.0, %v312
        %314 = vmatmul.f32.gmra.mxu0 %v251
        %v315 = vpop.f32.mrf.mxu0
        %v316 = vadd.f32 0.0, %v315
        %317 = vmatmul.f32.gmra.mxu0 %v254
        %v318 = vpop.f32.mrf.mxu0
        %v319 = vadd.f32 0.0, %v318
        %320 = vmatmul.f32.gmra.mxu0 %v257
        %v321 = vpop.f32.mrf.mxu0
        %v322 = vadd.f32 0.0, %v321
        %323 = vmatmul.f32.gmra.mxu0 %v260
        %v324 = vpop.f32.mrf.mxu0
        %v325 = vadd.f32 0.0, %v324
        %326 = vmatmul.f32.gmra.mxu0 %v263
        %v327 = vpop.f32.mrf.mxu0
        %v328 = vadd.f32 0.0, %v327
        %329 = vmatmul.f32.gmra.mxu0 %v266
        %v330 = vpop.f32.mrf.mxu0
        %v331 = vadd.f32 0.0, %v330
        %332 = vmatmul.f32.gmra.mxu0 %v269
        %v333 = vpop.f32.mrf.mxu0
        %v334 = vadd.f32 0.0, %v333
        %335 = vmatmul.f32.gmra.mxu0 %v272
        %v336 = vpop.f32.mrf.mxu0
        %v337 = vadd.f32 0.0, %v336
        %338 = vmatmul.f32.gmra.mxu0 %v275
        %v339 = vpop.f32.mrf.mxu0
        %v340 = vadd.f32 0.0, %v339
        %341 = vmatmul.f32.gmra.mxu0 %v278
        %v342 = vpop.f32.mrf.mxu0
        %v343 = vadd.f32 0.0, %v342
        %344 = vdwg.mxu0
        %v345 = vmul.f32 %v298, 1.442695
        %v346 = vpow.pop %v345
        %v347 = vmul.f32 %v301, 1.442695
        %v348 = vpow.pop %v347
        %v349 = vmul.f32 %v304, 1.442695
        %v350 = vpow.pop %v349
        %v351 = vmul.f32 %v307, 1.442695
        %v352 = vpow.pop %v351
        %v353 = vmul.f32 %v310, 1.442695
        %v354 = vpow.pop %v353
        %v355 = vmul.f32 %v313, 1.442695
        %v356 = vpow.pop %v355
        %v357 = vmul.f32 %v316, 1.442695
        %v358 = vpow.pop %v357
        %v359 = vmul.f32 %v319, 1.442695
        %v360 = vpow.pop %v359
        %v361 = vmul.f32 %v322, 1.442695
        %v362 = vpow.pop %v361
        %v363 = vmul.f32 %v325, 1.442695
        %v364 = vpow.pop %v363
        %v365 = vmul.f32 %v328, 1.442695
        %v366 = vpow.pop %v365
        %v367 = vmul.f32 %v331, 1.442695
        %v368 = vpow.pop %v367
        %v369 = vmul.f32 %v334, 1.442695
        %v370 = vpow.pop %v369
        %v371 = vmul.f32 %v337, 1.442695
        %v372 = vpow.pop %v371
        %v373 = vmul.f32 %v340, 1.442695
        %v374 = vpow.pop %v373
        %v375 = vmul.f32 %v343, 1.442695
        %v376 = vpow.pop %v375
        %v377 = vld [vmem:[#allocation2] sm:$0xff]
        %v378 = vld [vmem:[%s166] sm:$0xff]
        %379 = vmatpush.msra.mxu0 %v376
        %380 = vmatpush.msra.mxu0 %v374
        %381 = vmatpush.msra.mxu0 %v372
        %382 = vmatpush.msra.mxu0 %v370
        %383 = vmatpush.msra.mxu0 %v368
        %384 = vmatpush.msra.mxu0 %v366
        %385 = vmatpush.msra.mxu0 %v364
        %386 = vmatpush.msra.mxu0 %v362
        %387 = vmatpush.msra.mxu0 %v360
        %388 = vmatpush.msra.mxu0 %v358
        %389 = vmatpush.msra.mxu0 %v356
        %390 = vmatpush.msra.mxu0 %v354
        %391 = vmatpush.msra.mxu0 %v352
        %392 = vmatpush.msra.mxu0 %v350
        %393 = vmatpush.msra.mxu0 %v348
        %394 = vmatpush.msra.mxu0 %v346
        %395 = vmatmul.f32.gmra.mxu0 %v378
        %v396 = vpop.f32.mrf.mxu0
        %v397 = vadd.f32 0.0, %v396
        %398 = vdwg.mxu0
        %v399 = vadd.f32 %v377, %v397
        %400 = vst [vmem:[#allocation2] sm:$0xff] %v399
        // Predicated region
        $region33: #{tpu_custom_call.1} parent=27 // pred_check
          %p401 = pneg %p173
        $region34: #{tpu_custom_call.1} parent=27 // pred_check_branch
          %403 = sbr.rel (%p401) target = $region36
        $region35: #{tpu_custom_call.1} parent=27 // pred_region
          %v404 = vld [vmem:[#allocation2] sm:$0xff]
          %v405 = vadd.f32 %v404, 1e-08
          %v406 = vrcp.pop %v405
          %v407 = vperm.slane %v406, 4
          %v408 = vmul.f32 %v404, %v407
          %v410 = vrot.slane %v406, 1
          %v412 = vmul.f32 %v404, %v410
          %v413 = vsub.f32 0.0, %v404
          %v414 = vmul.f32 %v413, 1.442695
          %v415 = vpow.pop %v414
          %v416 = vsub.f32 1.0, %v415
          %v417 = vperm.slane %v416, 5
          %v418 = vmul.f32 %v408, %v417
          %v419 = vsub.f32 1.0, %v416
          %v420 = vperm.slane %v419, 5
          %v421 = vadd.f32 %v418, %v420
          %422 = vst [vmem:[%s162] sm:$0x7] %v421
          %423 = vst [vmem:[%s162] sm:$0x8] %v412
          %424 = vst [vmem:[%s162 - $0x1] sm:$0x20] %v416
        $region36: #{tpu_custom_call.1} parent=27 // pred_fallthru
          _
        %s425 = sand.u32 %s88, 1
        %s426 = scalar_lea.sflag [#allocation4], %s425
        %s427 = sand.u32 %s88, 1
        %s428 = smul.addr %s427, 8
        %s429 = scalar_lea.vmem [#allocation3], %s428
        // Predicated region
        $region37: #{tpu_custom_call.1} parent=27 // pred_check
          %p430 = pneg %p98
        $region38: #{tpu_custom_call.1} parent=27 // pred_check_branch
          %432 = sbr.rel (%p430) target = $region40
        $region39: #{tpu_custom_call.1} parent=27 // pred_region
          %434 = vsyncadd %s426, 0
          %s435 = smul.addr %s20, 8
          %s436 = scalar_lea.hbm %s2, %s435
          %s438 = sshll.u32 %s429, 4
          %s439 = int_to_ptr.vmem [resolvable:$true] %s438
          %s440 = sshll.u32 %s436, 4
          %s441 = int_to_ptr.hbm [resolvable:$true] %s440
          %443 = dma.vmem_to_hbm [thread:$0]  %s439, 128, %s441, %s426
        $region40: #{tpu_custom_call.1} parent=27 // pred_fallthru
          _
      $region28: #{tpu_custom_call.1} parent=5 // pred_fallthru
        _
      %p444 = scmp.le.s32.totalorder 2, %s11
      // Predicated region
      $region41: #{tpu_custom_call.1} parent=5 // pred_check
        %p445 = pneg %p444
      $region42: #{tpu_custom_call.1} parent=5 // pred_check_branch
        %447 = sbr.rel (%p445) target = $region44
      $region43: #{tpu_custom_call.1} parent=5 // pred_region
        %s448 = ssub.s32 %s11, 2
        // Predicated region
        $region45: #{tpu_custom_call.1} parent=43 // pred_check
          %p449 = pneg %p104
        $region46: #{tpu_custom_call.1} parent=43 // pred_check_branch
          %451 = sbr.rel (%p449) target = $region48
        $region47: #{tpu_custom_call.1} parent=43 // pred_region
          %s452 = sand.u32 %s89, 1
          %s453 = scalar_lea.sflag [#allocation4], %s452
          %s454 = sand.u32 %s89, 1
          %s455 = smul.addr %s454, 8
          %s456 = scalar_lea.vmem [#allocation3], %s455
          %458 = dma.done %s453, 128
        $region48: #{tpu_custom_call.1} parent=43 // pred_fallthru
          _
      $region44: #{tpu_custom_call.1} parent=5 // pred_fallthru
        _
    $region6: #{tpu_custom_call.1} parent=1 // loop_footer
      %s15 = sadd.s32 1, %s11
    $region7: #{tpu_custom_call.1} parent=1 // loop_footer_branch
      %10 = sbr.rel target = $region3
    $region8: #{tpu_custom_call.1} parent=1 // loop_exit
      _
    %459 = vsyncpa [#allocation4], 1
    %s460 = scalar_lea.sflag [#allocation4], 1
    %461 = vsyncpa %s460, 1

</llo_original>
